<compile_context>
chip_gen: v5e
topology: v5e:2x2
jax: 0.10.0
libtpu: 0.0.40
codegen_flags: <defaults>
</compile_context>

<pallas_src>
import math

import jax
import jax.numpy as jnp
from jax.experimental import pallas as pl
from jax.experimental.pallas import tpu as pltpu


def _lane_roll(t, shift, L):
    """Rotate the lane (last) axis right by a static `shift` (pure jnp, portable)."""
    s = shift % L
    if s == 0:
        return t
    return jnp.concatenate([t[..., L - s:], t[..., :L - s]], axis=-1)


def _make_kernel(W, has_halo, has_grads):
    """Sobel dx/dy/slope on a row-folded, lane-dense layout.

    Kernel view of the image: (bN, tR, L) with L = k*W — each "folded row" holds k
    consecutive image rows side by side in the lane axis.  Horizontal (j+-1)
    neighbours are lane shifts by 1, masked at the per-segment borders (lane % W);
    vertical (i+-1) neighbours are lane shifts by W with a one-folded-row sublane
    carry (halo row at tile borders, zero at the image borders).
    """

    def kernel(bias_ref, *refs):
        i = 0
        xc_ref = refs[i]; i += 1
        if has_halo:
            xt_ref, xb_ref = refs[i], refs[i + 1]; i += 2
        slope_ref = refs[i]; i += 1
        if has_grads:
            dx_ref, dy_ref = refs[i], refs[i + 1]

        x = xc_ref[...]
        bN, tR, L = x.shape
        bias = bias_ref[0]

        # Hoisted masks (image column j = lane % W).
        lane = jax.lax.broadcasted_iota(jnp.int32, (1, 1, L), 2)
        col = lane % W
        is_left = col == 0
        is_right = col == W - 1
        same_row_up = lane >= W          # lane p-W is still the same image row
        same_row_dn = lane < L - W       # lane p+W is still the same image row

        def h_terms(t):
            # horizontally shifted neighbours with fused zero padding
            tl = jnp.where(is_left, 0.0, _lane_roll(t, 1, L))        # x[., j-1]
            tr = jnp.where(is_right, 0.0, _lane_roll(t, L - 1, L))   # x[., j+1]
            return tr - tl, tl + 2.0 * t + tr                        # hd, hs

        hd, hs = h_terms(x)

        if has_halo:
            r = pl.program_id(1)
            top_ok = r > 0
            bot_ok = r < pl.num_programs(1) - 1
            # NaN-safe fused vertical zero padding at the image borders.
            x_top = jnp.where(top_ok, xt_ref[:, 7:8, :], 0.0)   # folded row above tile
            x_bot = jnp.where(bot_ok, xb_ref[:, 0:1, :], 0.0)   # folded row below tile
            hd_t, hs_t = h_terms(x_top)
            hd_b, hs_b = h_terms(x_bot)
        else:
            zrow = jnp.zeros((bN, 1, L), x.dtype)
            hd_t = hs_t = hd_b = hs_b = zrow

        def shift_up(t, t_above):
            # value of t at the previous image row (flat index - W)
            rt = _lane_roll(t, W, L)
            ra = _lane_roll(t_above, W, L)
            prev = ra if tR == 1 else jnp.concatenate([ra, rt[:, : tR - 1, :]], axis=1)
            return prev if W == L else jnp.where(same_row_up, rt, prev)

        def shift_dn(t, t_below):
            # value of t at the next image row (flat index + W)
            rt = _lane_roll(t, L - W, L)
            rb = _lane_roll(t_below, L - W, L)
            nxt = rb if tR == 1 else jnp.concatenate([rt[:, 1:, :], rb], axis=1)
            return nxt if W == L else jnp.where(same_row_dn, rt, nxt)

        # weight1 -> dx = hd[i-1] + 2*hd[i] + hd[i+1];  weight2 -> dy = hs[i+1] - hs[i-1]
        dx = hd * 2.0 + shift_up(hd, hd_t) + shift_dn(hd, hd_b) + bias
        if has_grads:
            dx_ref[...] = dx
        dy = shift_dn(hs, hs_b) - shift_up(hs, hs_t) + bias
        if has_grads:
            dy_ref[...] = dy
        slope_ref[...] = jnp.sqrt(dx * dx + dy * dy)

    return kernel


def _fold_factor(H, W):
    """Rows folded into the lane axis so stores are lane-dense."""
    if W >= 128:
        return 1
    k = 128 // math.gcd(W, 128)          # smallest k with (k*W) % 128 == 0
    if k > max(8, H):                    # awkward W: settle for k*W >= 128
        k = -(-128 // W)
    return k


def _plan(N, H, W, budget_elems):
    """Choose fold factor k, row-tile tR, padded folded rows R, and batch fold bN."""
    k = _fold_factor(H, W)
    L = k * W
    R0 = -(-H // k)                                        # folded rows before padding

    if R0 * L <= budget_elems:
        tR_fit = R0
    else:
        tR_fit = max(8, (min(R0, budget_elems // L) // 8) * 8)
    # v7x megacore: if batch cannot give >=2 grid steps, split rows instead.
    if N == 1 and tR_fit >= R0 and R0 >= 16:
        tR_fit = max(8, (R0 // 2) // 8 * 8)

    if tR_fit >= R0:
        tR, R, nr = R0, R0, 1
    else:
        tR = tR_fit
        R = -(-R0 // tR) * tR                              # pad so row-tiles divide evenly
        nr = R // tR

    bN = 1
    if nr == 1:                                            # fold several small images per step
        max_bn = max(1, budget_elems // max(1, R * L))
        min_steps = 2 if N >= 2 else 1                     # keep both v7x TCs busy
        for c in range(min(N, max_bn), 0, -1):
            if N % c == 0 and (N // c) * nr >= min_steps:
                bN = c
                break
    return k, L, R, tR, nr, bN


def slope_map(x, bias, *, compute_grads=True, block_budget_elems=256 * 1024):
    """x: (N, 1, H, W), bias: (1,)  ->  (slope, dx, dy) each (N, 1, H, W)
    (or just slope if compute_grads=False).  Matches torch.conv2d Sobel + sqrt."""
    N, C, H, W = x.shape
    assert C == 1, "Slope_map uses single-channel (1,1,3,3) Sobel filters"
    x = x.astype(jnp.float32)
    bias_arr = jnp.asarray(bias, jnp.float32).reshape((1,))

    k, L, R, tR, nr, bN = _plan(N, H, W, block_budget_elems)
    nb = N // bN
    H_pad = R * k

    # Layout plumbing (free-ish): fold k image rows into the lane axis.
    x3 = x.reshape(N, H, W)
    if H_pad != H:
        # Zero rows below the image reproduce conv2d's zero padding for row H-1;
        # the extra output rows are sliced off after the kernel.
        x3 = jnp.pad(x3, ((0, 0), (0, H_pad - H), (0, 0)))
    xf = x3.reshape(N, R, L)

    has_halo = nr > 1
    center = pl.BlockSpec((bN, tR, L), lambda b, r: (b, r, 0))
    in_specs = [pl.BlockSpec(memory_space=pltpu.MemorySpace.SMEM), center]
    args = [bias_arr, xf]
    if has_halo:
        n_slabs = R // 8
        in_specs += [
            # 8-folded-row slab whose LAST row is the folded row just above the tile
            pl.BlockSpec((bN, 8, L),
                         lambda b, r: (b, jnp.maximum(r * (tR // 8) - 1, 0), 0)),
            # 8-folded-row slab whose FIRST row is the folded row just below the tile
            pl.BlockSpec((bN, 8, L),
                         lambda b, r: (b, jnp.minimum((r + 1) * (tR // 8), n_slabs - 1), 0)),
        ]
        args += [xf, xf]

    n_out = 3 if compute_grads else 1
    out_shape = tuple(jax.ShapeDtypeStruct((N, R, L), jnp.float32) for _ in range(n_out))
    out_specs = (center,) * n_out

    # VMEM budget: double-buffered (1 input + n_out outputs) + halo slabs + ~12 temps.
    block_bytes = 4 * bN * tR * L
    halo_bytes = (2 * 2 * 4 * bN * 8 * L) if has_halo else 0
    need = (2 * (1 + n_out) + 12) * block_bytes + halo_bytes
    vmem_limit = int(min(max(need, 32 << 20), 40 << 20))   # v7x-safe, raises v5e default

    outs = pl.pallas_call(
        _make_kernel(W, has_halo, compute_grads),
        out_shape=out_shape,
        grid=(nb, nr),
        in_specs=in_specs,
        out_specs=out_specs,
        compiler_params=pltpu.CompilerParams(
            dimension_semantics=("parallel", "parallel"),
            vmem_limit_bytes=vmem_limit),
    )(*args)

    def unfold(o):
        o = o.reshape(N, H_pad, W)
        if H_pad != H:
            o = o[:, :H, :]
        return o[:, None, :, :]

    if compute_grads:
        slope, dx, dy = outs
        return unfold(slope), unfold(dx), unfold(dy)
    return unfold(outs[0])


def _reference(x, bias):
    """Pure-JAX reference (lax conv, cross-correlation) for correctness checks."""
    w1 = jnp.array([[-1, 0, 1], [-2, 0, 2], [-1, 0, 1]], jnp.float32).reshape(1, 1, 3, 3)
    w2 = jnp.array([[-1, -2, -1], [0, 0, 0], [1, 2, 1]], jnp.float32).reshape(1, 1, 3, 3)
    dn = jax.lax.conv_dimension_numbers(x.shape, w1.shape, ("NCHW", "OIHW", "NCHW"))
    dx = jax.lax.conv_general_dilated(x, w1, (1, 1), ((1, 1), (1, 1)),
                                      dimension_numbers=dn) + bias[0]
    dy = jax.lax.conv_general_dilated(x, w2, (1, 1), ((1, 1), (1, 1)),
                                      dimension_numbers=dn) + bias[0]
    slope = jnp.sqrt(dx * dx + dy * dy)
    return slope, dx, dy


if __name__ == "__main__":
    key = jax.random.PRNGKey(0)
    N, C, H, W = 2, 1, 16, 16               # single channel, as the module requires
    x = jax.random.normal(key, (N, C, H, W), dtype=jnp.float32)

    # Module default: bias = zeros(1)
    bias = jnp.zeros((1,), dtype=jnp.float32)
    slope, dx, dy = slope_map(x, bias)
    jax.block_until_ready((slope, dx, dy))
    sr, dxr, dyr = _reference(x, bias)
    assert slope.shape == (N, 1, H, W)
    assert jnp.allclose(dx, dxr, atol=1e-5)
    assert jnp.allclose(dy, dyr, atol=1e-5)
    assert jnp.allclose(slope, sr, atol=1e-5)

    # Non-zero bias path.
    bias2 = jnp.full((1,), 0.25, dtype=jnp.float32)
    s2, dx2, dy2 = slope_map(x, bias2)
    s2r, dx2r, dy2r = _reference(x, bias2)
    assert jnp.allclose(dx2, dx2r, atol=1e-5)
    assert jnp.allclose(dy2, dy2r, atol=1e-5)
    assert jnp.allclose(s2, s2r, atol=1e-5)

    # Slope-only variant (drops 2/3 of the writeback traffic).
    s_only = slope_map(x, bias2, compute_grads=False)
    assert jnp.allclose(s_only, s2r, atol=1e-5)

    # Ragged-H path (H not a multiple of the fold factor -> wrapper zero-pad + slice).
    xr_in = jax.random.normal(jax.random.PRNGKey(2), (1, 1, 12, 16), dtype=jnp.float32)
    sr3, dxr3, dyr3 = slope_map(xr_in, bias)
    sr3r, dxr3r, dyr3r = _reference(xr_in, bias)
    assert jnp.allclose(dxr3, dxr3r, atol=1e-5)
    assert jnp.allclose(dyr3, dyr3r, atol=1e-5)
    assert jnp.allclose(sr3, sr3r, atol=1e-5)

    # Multi-row-tile (halo) path, forced with a tiny block budget.
    xh = jax.random.normal(jax.random.PRNGKey(1), (1, 1, 128, 16), dtype=jnp.float32)
    sh, dxh, dyh = slope_map(xh, bias, block_budget_elems=1024)
    shr, dxhr, dyhr = _reference(xh, bias)
    assert jnp.allclose(dxh, dxhr, atol=1e-5)
    assert jnp.allclose(dyh, dyhr, atol=1e-5)
    assert jnp.allclose(sh, shr, atol=1e-5)

    print("KERNEL_OK")
</pallas_src>

<mosaic_0001>
module attributes {stable_mosaic.version = 11 : i64} {
  func.func @kernel(%arg0: i32, %arg1: i32, %arg2: memref<1xf32, #tpu.memory_space<smem>>, %arg3: memref<1x2x128xf32, #tpu.memory_space<vmem>>, %arg4: memref<1x2x128xf32, #tpu.memory_space<vmem>>, %arg5: memref<1x2x128xf32, #tpu.memory_space<vmem>>, %arg6: memref<1x2x128xf32, #tpu.memory_space<vmem>>) attributes {dimension_semantics = [#tpu.dimension_semantics<parallel>, #tpu.dimension_semantics<parallel>], iteration_bounds = array<i64: 2, 1>, scalar_prefetch = 0 : i64, scratch_operands = 0 : i64, tpu.core_type = #tpu.core_type<tc>, window_params = [{transform_indices = @transform_0, window_bounds = array<i64: 1>}, {transform_indices = @transform_1, window_bounds = array<i64: 1, 2, 128>}, {transform_indices = @transform_2, window_bounds = array<i64: 1, 2, 128>}, {transform_indices = @transform_3, window_bounds = array<i64: 1, 2, 128>}, {transform_indices = @transform_4, window_bounds = array<i64: 1, 2, 128>}]} {
    %c0 = arith.constant 0 : index
    %c0_0 = arith.constant 0 : index
    %c0_1 = arith.constant 0 : index
    %0 = vector.load %arg3[%c0, %c0_0, %c0_1] : memref<1x2x128xf32, #tpu.memory_space<vmem>>, vector<1x2x128xf32>
    %c0_2 = arith.constant 0 : index
    %1 = memref.load %arg2[%c0_2] : memref<1xf32, #tpu.memory_space<smem>>
    %2 = tpu.iota {dimensions = array<i32: 2>} : vector<1x1x128xi32>
    %c16_i32 = arith.constant 16 : i32
    %c0_i32 = arith.constant 0 : i32
    %3 = arith.cmpi eq, %c16_i32, %c0_i32 : i32
    %c1_i32 = arith.constant 1 : i32
    %4 = arith.select %3, %c1_i32, %c16_i32 : i32
    %5 = vector.broadcast %4 : i32 to vector<1x1x128xi32>
    %6 = arith.remsi %2, %5 : vector<1x1x128xi32>
    %c0_i32_3 = arith.constant 0 : i32
    %7 = vector.broadcast %c0_i32_3 : i32 to vector<1x1x128xi32>
    %8 = arith.cmpi ne, %6, %7 : vector<1x1x128xi32>
    %c0_i32_4 = arith.constant 0 : i32
    %9 = vector.broadcast %c0_i32_4 : i32 to vector<1x1x128xi32>
    %10 = arith.cmpi slt, %6, %9 : vector<1x1x128xi32>
    %c0_i32_5 = arith.constant 0 : i32
    %11 = arith.cmpi slt, %4, %c0_i32_5 : i32
    %12 = vector.broadcast %11 : i1 to vector<1x1x128xi1>
    %13 = vector.broadcast %12 : vector<1x1x128xi1> to vector<1x1x128xi1>
    %14 = arith.xori %10, %13 : vector<1x1x128xi1>
    %15 = arith.andi %14, %8 : vector<1x1x128xi1>
    %16 = vector.broadcast %4 : i32 to vector<1x1x128xi32>
    %17 = arith.addi %6, %16 : vector<1x1x128xi32>
    %18 = arith.select %15, %17, %6 : vector<1x1x128xi1>, vector<1x1x128xi32>
    %c0_i32_6 = arith.constant 0 : i32
    %19 = vector.broadcast %c0_i32_6 : i32 to vector<1x1x128xi32>
    %20 = arith.cmpi eq, %18, %19 : vector<1x1x128xi32>
    %c15_i32 = arith.constant 15 : i32
    %21 = vector.broadcast %c15_i32 : i32 to vector<1x1x128xi32>
    %22 = arith.cmpi eq, %18, %21 : vector<1x1x128xi32>
    %c16_i32_7 = arith.constant 16 : i32
    %23 = vector.broadcast %c16_i32_7 : i32 to vector<1x1x128xi32>
    %24 = arith.cmpi sge, %2, %23 : vector<1x1x128xi32>
    %c112_i32 = arith.constant 112 : i32
    %25 = vector.broadcast %c112_i32 : i32 to vector<1x1x128xi32>
    %26 = arith.cmpi slt, %2, %25 : vector<1x1x128xi32>
    %27 = vector.extract_strided_slice %0 {offsets = [0, 0, 127], sizes = [1, 2, 1], strides = [1, 1, 1]} : vector<1x2x128xf32> to vector<1x2x1xf32>
    %28 = vector.extract_strided_slice %0 {offsets = [0, 0, 0], sizes = [1, 2, 127], strides = [1, 1, 1]} : vector<1x2x128xf32> to vector<1x2x127xf32>
    %29 = tpu.concatenate %27, %28 in 2 : vector<1x2x1xf32>, vector<1x2x127xf32> -> vector<1x2x128xf32>
    %cst = arith.constant 0.000000e+00 : f32
    %30 = vector.shape_cast %20 : vector<1x1x128xi1> to vector<1x1x128xi1>
    %31 = vector.broadcast %30 : vector<1x1x128xi1> to vector<1x2x128xi1>
    %32 = vector.broadcast %cst : f32 to vector<1x2x128xf32>
    %33 = arith.select %31, %32, %29 : vector<1x2x128xi1>, vector<1x2x128xf32>
    %34 = vector.extract_strided_slice %0 {offsets = [0, 0, 1], sizes = [1, 2, 127], strides = [1, 1, 1]} : vector<1x2x128xf32> to vector<1x2x127xf32>
    %35 = vector.extract_strided_slice %0 {offsets = [0, 0, 0], sizes = [1, 2, 1], strides = [1, 1, 1]} : vector<1x2x128xf32> to vector<1x2x1xf32>
    %36 = tpu.concatenate %34, %35 in 2 : vector<1x2x127xf32>, vector<1x2x1xf32> -> vector<1x2x128xf32>
    %cst_8 = arith.constant 0.000000e+00 : f32
    %37 = vector.shape_cast %22 : vector<1x1x128xi1> to vector<1x1x128xi1>
    %38 = vector.broadcast %37 : vector<1x1x128xi1> to vector<1x2x128xi1>
    %39 = vector.broadcast %cst_8 : f32 to vector<1x2x128xf32>
    %40 = arith.select %38, %39, %36 : vector<1x2x128xi1>, vector<1x2x128xf32>
    %41 = arith.subf %40, %33 : vector<1x2x128xf32>
    %cst_9 = arith.constant 2.000000e+00 : f32
    %42 = vector.broadcast %cst_9 : f32 to vector<1x2x128xf32>
    %43 = arith.mulf %42, %0 : vector<1x2x128xf32>
    %44 = arith.addf %33, %43 : vector<1x2x128xf32>
    %45 = arith.addf %44, %40 : vector<1x2x128xf32>
    %cst_10 = arith.constant 0.000000e+00 : f32
    %46 = vector.broadcast %cst_10 : f32 to vector<1x1x128xf32>
    %cst_11 = arith.constant 2.000000e+00 : f32
    %47 = vector.broadcast %cst_11 : f32 to vector<1x2x128xf32>
    %48 = arith.mulf %41, %47 : vector<1x2x128xf32>
    %49 = vector.extract_strided_slice %41 {offsets = [0, 0, 112], sizes = [1, 2, 16], strides = [1, 1, 1]} : vector<1x2x128xf32> to vector<1x2x16xf32>
    %50 = vector.extract_strided_slice %41 {offsets = [0, 0, 0], sizes = [1, 2, 112], strides = [1, 1, 1]} : vector<1x2x128xf32> to vector<1x2x112xf32>
    %51 = tpu.concatenate %49, %50 in 2 : vector<1x2x16xf32>, vector<1x2x112xf32> -> vector<1x2x128xf32>
    %52 = vector.extract_strided_slice %46 {offsets = [0, 0, 112], sizes = [1, 1, 16], strides = [1, 1, 1]} : vector<1x1x128xf32> to vector<1x1x16xf32>
    %53 = vector.extract_strided_slice %46 {offsets = [0, 0, 0], sizes = [1, 1, 112], strides = [1, 1, 1]} : vector<1x1x128xf32> to vector<1x1x112xf32>
    %54 = tpu.concatenate %52, %53 in 2 : vector<1x1x16xf32>, vector<1x1x112xf32> -> vector<1x1x128xf32>
    %55 = vector.extract_strided_slice %51 {offsets = [0, 0, 0], sizes = [1, 1, 128], strides = [1, 1, 1]} : vector<1x2x128xf32> to vector<1x1x128xf32>
    %56 = tpu.concatenate %54, %55 in 1 : vector<1x1x128xf32>, vector<1x1x128xf32> -> vector<1x2x128xf32>
    %57 = vector.shape_cast %24 : vector<1x1x128xi1> to vector<1x1x128xi1>
    %58 = vector.broadcast %57 : vector<1x1x128xi1> to vector<1x2x128xi1>
    %59 = arith.select %58, %51, %56 : vector<1x2x128xi1>, vector<1x2x128xf32>
    %60 = arith.addf %48, %59 : vector<1x2x128xf32>
    %61 = vector.extract_strided_slice %41 {offsets = [0, 0, 16], sizes = [1, 2, 112], strides = [1, 1, 1]} : vector<1x2x128xf32> to vector<1x2x112xf32>
    %62 = vector.extract_strided_slice %41 {offsets = [0, 0, 0], sizes = [1, 2, 16], strides = [1, 1, 1]} : vector<1x2x128xf32> to vector<1x2x16xf32>
    %63 = tpu.concatenate %61, %62 in 2 : vector<1x2x112xf32>, vector<1x2x16xf32> -> vector<1x2x128xf32>
    %64 = vector.extract_strided_slice %46 {offsets = [0, 0, 16], sizes = [1, 1, 112], strides = [1, 1, 1]} : vector<1x1x128xf32> to vector<1x1x112xf32>
    %65 = vector.extract_strided_slice %46 {offsets = [0, 0, 0], sizes = [1, 1, 16], strides = [1, 1, 1]} : vector<1x1x128xf32> to vector<1x1x16xf32>
    %66 = tpu.concatenate %64, %65 in 2 : vector<1x1x112xf32>, vector<1x1x16xf32> -> vector<1x1x128xf32>
    %67 = vector.extract_strided_slice %63 {offsets = [0, 1, 0], sizes = [1, 1, 128], strides = [1, 1, 1]} : vector<1x2x128xf32> to vector<1x1x128xf32>
    %68 = tpu.concatenate %67, %66 in 1 : vector<1x1x128xf32>, vector<1x1x128xf32> -> vector<1x2x128xf32>
    %69 = vector.shape_cast %26 : vector<1x1x128xi1> to vector<1x1x128xi1>
    %70 = vector.broadcast %69 : vector<1x1x128xi1> to vector<1x2x128xi1>
    %71 = arith.select %70, %63, %68 : vector<1x2x128xi1>, vector<1x2x128xf32>
    %72 = arith.addf %60, %71 : vector<1x2x128xf32>
    %73 = vector.broadcast %1 : f32 to vector<1x2x128xf32>
    %74 = arith.addf %72, %73 : vector<1x2x128xf32>
    %c0_12 = arith.constant 0 : index
    %c0_13 = arith.constant 0 : index
    %c0_14 = arith.constant 0 : index
    %75 = vector.load %arg5[%c0_12, %c0_13, %c0_14] : memref<1x2x128xf32, #tpu.memory_space<vmem>>, vector<1x2x128xf32>
    tpu.vector_store %arg5[%c0_12, %c0_13, %c0_14], %74 {strides = array<i32>} : memref<1x2x128xf32, #tpu.memory_space<vmem>>, vector<1x2x128xf32>,
    %76 = vector.extract_strided_slice %45 {offsets = [0, 0, 16], sizes = [1, 2, 112], strides = [1, 1, 1]} : vector<1x2x128xf32> to vector<1x2x112xf32>
    %77 = vector.extract_strided_slice %45 {offsets = [0, 0, 0], sizes = [1, 2, 16], strides = [1, 1, 1]} : vector<1x2x128xf32> to vector<1x2x16xf32>
    %78 = tpu.concatenate %76, %77 in 2 : vector<1x2x112xf32>, vector<1x2x16xf32> -> vector<1x2x128xf32>
    %79 = vector.extract_strided_slice %46 {offsets = [0, 0, 16], sizes = [1, 1, 112], strides = [1, 1, 1]} : vector<1x1x128xf32> to vector<1x1x112xf32>
    %80 = vector.extract_strided_slice %46 {offsets = [0, 0, 0], sizes = [1, 1, 16], strides = [1, 1, 1]} : vector<1x1x128xf32> to vector<1x1x16xf32>
    %81 = tpu.concatenate %79, %80 in 2 : vector<1x1x112xf32>, vector<1x1x16xf32> -> vector<1x1x128xf32>
    %82 = vector.extract_strided_slice %78 {offsets = [0, 1, 0], sizes = [1, 1, 128], strides = [1, 1, 1]} : vector<1x2x128xf32> to vector<1x1x128xf32>
    %83 = tpu.concatenate %82, %81 in 1 : vector<1x1x128xf32>, vector<1x1x128xf32> -> vector<1x2x128xf32>
    %84 = vector.shape_cast %26 : vector<1x1x128xi1> to vector<1x1x128xi1>
    %85 = vector.broadcast %84 : vector<1x1x128xi1> to vector<1x2x128xi1>
    %86 = arith.select %85, %78, %83 : vector<1x2x128xi1>, vector<1x2x128xf32>
    %87 = vector.extract_strided_slice %45 {offsets = [0, 0, 112], sizes = [1, 2, 16], strides = [1, 1, 1]} : vector<1x2x128xf32> to vector<1x2x16xf32>
    %88 = vector.extract_strided_slice %45 {offsets = [0, 0, 0], sizes = [1, 2, 112], strides = [1, 1, 1]} : vector<1x2x128xf32> to vector<1x2x112xf32>
    %89 = tpu.concatenate %87, %88 in 2 : vector<1x2x16xf32>, vector<1x2x112xf32> -> vector<1x2x128xf32>
    %90 = vector.extract_strided_slice %46 {offsets = [0, 0, 112], sizes = [1, 1, 16], strides = [1, 1, 1]} : vector<1x1x128xf32> to vector<1x1x16xf32>
    %91 = vector.extract_strided_slice %46 {offsets = [0, 0, 0], sizes = [1, 1, 112], strides = [1, 1, 1]} : vector<1x1x128xf32> to vector<1x1x112xf32>
    %92 = tpu.concatenate %90, %91 in 2 : vector<1x1x16xf32>, vector<1x1x112xf32> -> vector<1x1x128xf32>
    %93 = vector.extract_strided_slice %89 {offsets = [0, 0, 0], sizes = [1, 1, 128], strides = [1, 1, 1]} : vector<1x2x128xf32> to vector<1x1x128xf32>
    %94 = tpu.concatenate %92, %93 in 1 : vector<1x1x128xf32>, vector<1x1x128xf32> -> vector<1x2x128xf32>
    %95 = vector.shape_cast %24 : vector<1x1x128xi1> to vector<1x1x128xi1>
    %96 = vector.broadcast %95 : vector<1x1x128xi1> to vector<1x2x128xi1>
    %97 = arith.select %96, %89, %94 : vector<1x2x128xi1>, vector<1x2x128xf32>
    %98 = arith.subf %86, %97 : vector<1x2x128xf32>
    %99 = vector.broadcast %1 : f32 to vector<1x2x128xf32>
    %100 = arith.addf %98, %99 : vector<1x2x128xf32>
    %c0_15 = arith.constant 0 : index
    %c0_16 = arith.constant 0 : index
    %c0_17 = arith.constant 0 : index
    %101 = vector.load %arg6[%c0_15, %c0_16, %c0_17] : memref<1x2x128xf32, #tpu.memory_space<vmem>>, vector<1x2x128xf32>
    tpu.vector_store %arg6[%c0_15, %c0_16, %c0_17], %100 {strides = array<i32>} : memref<1x2x128xf32, #tpu.memory_space<vmem>>, vector<1x2x128xf32>,
    %102 = arith.mulf %74, %74 : vector<1x2x128xf32>
    %103 = arith.mulf %100, %100 : vector<1x2x128xf32>
    %104 = arith.addf %102, %103 : vector<1x2x128xf32>
    %105 = math.sqrt %104 : vector<1x2x128xf32>
    %c0_18 = arith.constant 0 : index
    %c0_19 = arith.constant 0 : index
    %c0_20 = arith.constant 0 : index
    %106 = vector.load %arg4[%c0_18, %c0_19, %c0_20] : memref<1x2x128xf32, #tpu.memory_space<vmem>>, vector<1x2x128xf32>
    tpu.vector_store %arg4[%c0_18, %c0_19, %c0_20], %105 {strides = array<i32>} : memref<1x2x128xf32, #tpu.memory_space<vmem>>, vector<1x2x128xf32>,
    return
  }
  func.func @transform_0(%arg0: i32, %arg1: i32) -> i32 {
    %c0_i32 = arith.constant 0 : i32
    %c0_i32_0 = arith.constant 0 : i32
    return %c0_i32 : i32
  }
  func.func @transform_1(%arg0: i32, %arg1: i32) -> (i32, i32, i32) {
    %c0_i32 = arith.constant 0 : i32
    %c0_i32_0 = arith.constant 0 : i32
    return %arg0, %arg1, %c0_i32 : i32, i32, i32
  }
  func.func @transform_2(%arg0: i32, %arg1: i32) -> (i32, i32, i32) {
    %c0_i32 = arith.constant 0 : i32
    %c0_i32_0 = arith.constant 0 : i32
    return %arg0, %arg1, %c0_i32 : i32, i32, i32
  }
  func.func @transform_3(%arg0: i32, %arg1: i32) -> (i32, i32, i32) {
    %c0_i32 = arith.constant 0 : i32
    %c0_i32_0 = arith.constant 0 : i32
    return %arg0, %arg1, %c0_i32 : i32, i32, i32
  }
  func.func @transform_4(%arg0: i32, %arg1: i32) -> (i32, i32, i32) {
    %c0_i32 = arith.constant 0 : i32
    %c0_i32_0 = arith.constant 0 : i32
    return %arg0, %arg1, %c0_i32 : i32, i32, i32
  }
}

</mosaic_0001>

<llo_original>
// kernel: tpu_custom_call.1
$region0: #{tpu_custom_call.1}
  #allocation0 [shape = 'u32[]', space=smem, size = 0x4, offset = 0x4, fixed_abs, tag = 'smem constant byte address 0x4 - core index']
  #allocation1 [shape = 'u32[72,128]{1,0:T(1,128)}', space=vmem, size = 0x9000, scoped, tag = 'internal scratch']
  #allocation2 [shape = 'f32[1]{0:T(128)S(6)}', space=smem, size = 0x200, scoped, tag = 'scoped memory for tpu_custom_call.1']
  %s0 = inlined_call_operand.<no memory space> [shape: f32[1], index: 0, kind: input, shape index: {}]
  %s1 = inlined_call_operand.hbm [shape: f32[2,2,128], index: 1, kind: input, shape index: {}]
  %s2 = inlined_call_operand.hbm [shape: f32[2,2,128], index: 2, kind: output, shape index: {0}]
  %s3 = inlined_call_operand.hbm [shape: f32[2,2,128], index: 3, kind: output, shape index: {1}]
  %s4 = inlined_call_operand.hbm [shape: f32[2,2,128], index: 4, kind: output, shape index: {2}]
  %5 = xla_tuple %s2, %s3, %s4
  %s6 = sld [smem:[#allocation0]]
  $region61: #{tpu_custom_call.1} parent=0
    _
  %s8 = ssub.s32 1, %s6
  %s9 = scalar_select 0, %s8, %s6
  %10 = sst [smem:[#allocation2]] %s0
  $region1: #{tpu_custom_call.1} parent=0
    #allocation3 [shape = 'u8[2048]{0}', space=vmem, size = 0x800, scoped, tag = 'input window, operand 1']
    #allocation4 [shape = 's32[2]{0}', space=sflag, size = 0x8, scoped, tag = 'scoped memory for tpu_custom_call.1']
    #allocation5 [shape = 's32[2]{0}', space=sflag, size = 0x8, scoped, tag = 'scoped memory for tpu_custom_call.1']
    #allocation6 [shape = 'u8[2048]{0}', space=vmem, size = 0x800, scoped, tag = 'output window, operand 0']
    #allocation7 [shape = 'u8[2048]{0}', space=vmem, size = 0x800, scoped, tag = 'output window, operand 1']
    #allocation8 [shape = 's32[2]{0}', space=sflag, size = 0x8, scoped, tag = 'scoped memory for tpu_custom_call.1']
    #allocation9 [shape = 'u8[2048]{0}', space=vmem, size = 0x800, scoped, tag = 'output window, operand 2']
    %11 = vsyncpa [#allocation4], 0
    %s12 = scalar_lea.sflag [#allocation4], 1
    %13 = vsyncpa %s12, 0
    %14 = vsyncpa [#allocation5], 0
    %s15 = scalar_lea.sflag [#allocation5], 1
    %16 = vsyncpa %s15, 0
    %17 = vsyncpa [#allocation8], 0
    %s18 = scalar_lea.sflag [#allocation8], 1
    %19 = vsyncpa %s18, 0
    loop: start=0, step=1, limit=4
    $region2: #{tpu_custom_call.1} parent=1 // loop_pre_header
      _
    $region3: #{tpu_custom_call.1} parent=1 // loop_header
      %s21 = sphi 0, %s25
      %p22 = scmp.ge.s32.totalorder %s21, 4
      %s28 = sphi 0, %s40
      %s29 = sphi 0, %s36
      %s30 = sphi 0, %s28
      %s31 = sphi 0, %s29
      %s32 = sphi 0, %s30
      %s33 = sphi 0, %s31
      %s41 = sphi 0, %s41
      %s43 = sphi 0, %s41
      %s44 = sphi 0, %s43
      %s58 = sphi 0, %s44
      %s66 = sphi 0, %s68
      %s69 = sphi 0, %s66
      %s70 = sphi 0, %s69
      %s86 = sphi 0, %s70
      %s94 = sphi 0, %s96
      %s97 = sphi 0, %s94
      %s98 = sphi 0, %s97
      %s114 = sphi 0, %s98
      %s122 = sphi 0, %s124
      %s125 = sphi 0, %s122
      %s126 = sphi 0, %s125
      %s142 = sphi 0, %s126
      %s150 = sphi 0, %s152
      %s153 = sphi 0, %s150
      %s154 = sphi 0, %s153
      %s170 = sphi 0, %s154
    $region4: #{tpu_custom_call.1} parent=1 // loop_header_branch
      %24 = sbr.rel (%p22) target = $region8
    $region5: #{tpu_custom_call.1} parent=1 // loop_body
      %s26 = ssub.s32 %s21, 1
      %s27 = ssub.s32 %s21, 2
      %s34 = sadd.s32 1, %s29
      %p35 = scmp.ge.s32.totalorder %s34, 1
      %s36 = scalar_select %p35, 0, %s34
      %s37 = sadd.s32 1, %s28
      %s38 = scalar_select %p35, %s37, %s28
      %p39 = scmp.ge.s32.totalorder %s38, 2
      %s40 = scalar_select %p39, 0, %s38
      %s42 = sadd.s32 %s41, 1
      %p45 = scmp.eq.s32.totalorder %s21, 1
      %p46 = scmp.ne.s32.totalorder %s41, %s43
      %p47 = scmp.eq.s32.totalorder %s21, 0
      %p48 = por %p46, %p47
      %p49 = scmp.ne.s32.totalorder %s41, %s43
      %p50 = scmp.eq.s32.totalorder %s26, 1
      %p51 = por %p49, %p50
      %p52 = scmp.ne.s32.totalorder %s43, %s44
      %p53 = scmp.eq.s32.totalorder %s26, 0
      %p54 = por %p52, %p53
      %p55 = scmp.ne.s32.totalorder %s43, %s44
      %p56 = scmp.eq.s32.totalorder %s27, 1
      %p57 = por %p55, %p56
      %p59 = scmp.ne.s32.totalorder %s44, %s58
      %p60 = scmp.eq.s32.totalorder %s27, 0
      %p61 = por %p59, %p60
      %s62 = ssub.s32 %s28, %s40
      %s63 = ssub.s32 %s29, %s36
      %s64 = sor.u32 %s62, %s63
      %p65 = scmp.eq.s32.totalorder %s64, 0
      %s67 = sadd.s32 %s66, 1
      %s68 = scalar_select %p65, %s66, %s67
      %p71 = pneg %p65
      %p72 = scmp.eq.s32.totalorder %s21, 1
      %p73 = por %p71, %p72
      %p74 = scmp.ne.s32.totalorder %s66, %s69
      %p75 = scmp.eq.s32.totalorder %s21, 0
      %p76 = por %p74, %p75
      %p77 = scmp.ne.s32.totalorder %s66, %s69
      %p78 = scmp.eq.s32.totalorder %s26, 1
      %p79 = por %p77, %p78
      %p80 = scmp.ne.s32.totalorder %s69, %s70
      %p81 = scmp.eq.s32.totalorder %s26, 0
      %p82 = por %p80, %p81
      %p83 = scmp.ne.s32.totalorder %s69, %s70
      %p84 = scmp.eq.s32.totalorder %s27, 1
      %p85 = por %p83, %p84
      %p87 = scmp.ne.s32.totalorder %s70, %s86
      %p88 = scmp.eq.s32.totalorder %s27, 0
      %p89 = por %p87, %p88
      %s90 = ssub.s32 %s28, %s40
      %s91 = ssub.s32 %s29, %s36
      %s92 = sor.u32 %s90, %s91
      %p93 = scmp.eq.s32.totalorder %s92, 0
      %s95 = sadd.s32 %s94, 1
      %s96 = scalar_select %p93, %s94, %s95
      %p99 = pneg %p93
      %p100 = scmp.eq.s32.totalorder %s21, 1
      %p101 = por %p99, %p100
      %p102 = scmp.ne.s32.totalorder %s94, %s97
      %p103 = scmp.eq.s32.totalorder %s21, 0
      %p104 = por %p102, %p103
      %p105 = scmp.ne.s32.totalorder %s94, %s97
      %p106 = scmp.eq.s32.totalorder %s26, 1
      %p107 = por %p105, %p106
      %p108 = scmp.ne.s32.totalorder %s97, %s98
      %p109 = scmp.eq.s32.totalorder %s26, 0
      %p110 = por %p108, %p109
      %p111 = scmp.ne.s32.totalorder %s97, %s98
      %p112 = scmp.eq.s32.totalorder %s27, 1
      %p113 = por %p111, %p112
      %p115 = scmp.ne.s32.totalorder %s98, %s114
      %p116 = scmp.eq.s32.totalorder %s27, 0
      %p117 = por %p115, %p116
      %s118 = ssub.s32 %s28, %s40
      %s119 = ssub.s32 %s29, %s36
      %s120 = sor.u32 %s118, %s119
      %p121 = scmp.eq.s32.totalorder %s120, 0
      %s123 = sadd.s32 %s122, 1
      %s124 = scalar_select %p121, %s122, %s123
      %p127 = pneg %p121
      %p128 = scmp.eq.s32.totalorder %s21, 1
      %p129 = por %p127, %p128
      %p130 = scmp.ne.s32.totalorder %s122, %s125
      %p131 = scmp.eq.s32.totalorder %s21, 0
      %p132 = por %p130, %p131
      %p133 = scmp.ne.s32.totalorder %s122, %s125
      %p134 = scmp.eq.s32.totalorder %s26, 1
      %p135 = por %p133, %p134
      %p136 = scmp.ne.s32.totalorder %s125, %s126
      %p137 = scmp.eq.s32.totalorder %s26, 0
      %p138 = por %p136, %p137
      %p139 = scmp.ne.s32.totalorder %s125, %s126
      %p140 = scmp.eq.s32.totalorder %s27, 1
      %p141 = por %p139, %p140
      %p143 = scmp.ne.s32.totalorder %s126, %s142
      %p144 = scmp.eq.s32.totalorder %s27, 0
      %p145 = por %p143, %p144
      %s146 = ssub.s32 %s28, %s40
      %s147 = ssub.s32 %s29, %s36
      %s148 = sor.u32 %s146, %s147
      %p149 = scmp.eq.s32.totalorder %s148, 0
      %s151 = sadd.s32 %s150, 1
      %s152 = scalar_select %p149, %s150, %s151
      %p155 = pneg %p149
      %p156 = scmp.eq.s32.totalorder %s21, 1
      %p157 = por %p155, %p156
      %p158 = scmp.ne.s32.totalorder %s150, %s153
      %p159 = scmp.eq.s32.totalorder %s21, 0
      %p160 = por %p158, %p159
      %p161 = scmp.ne.s32.totalorder %s150, %s153
      %p162 = scmp.eq.s32.totalorder %s26, 1
      %p163 = por %p161, %p162
      %p164 = scmp.ne.s32.totalorder %s153, %s154
      %p165 = scmp.eq.s32.totalorder %s26, 0
      %p166 = por %p164, %p165
      %p167 = scmp.ne.s32.totalorder %s153, %s154
      %p168 = scmp.eq.s32.totalorder %s27, 1
      %p169 = por %p167, %p168
      %p171 = scmp.ne.s32.totalorder %s154, %s170
      %p172 = scmp.eq.s32.totalorder %s27, 0
      %p173 = por %p171, %p172
      %p174 = scmp.le.s32.totalorder 1, %s21
      %p175 = scmp.lt.s32.totalorder %s21, 3
      %p176 = pnand %p174, %p175
      %p177 = pneg %p176
      // Predicated region
      $region9: #{tpu_custom_call.1} parent=5 // pred_check
        _
      $region10: #{tpu_custom_call.1} parent=5 // pred_check_branch
        %179 = sbr.rel (%p176) target = $region12
      $region11: #{tpu_custom_call.1} parent=5 // pred_region
        %s180 = ssub.s32 %s21, 1
        // Predicated region
        $region13: #{tpu_custom_call.1} parent=11 // pred_check
          %p181 = pneg %p54
        $region14: #{tpu_custom_call.1} parent=11 // pred_check_branch
          %183 = sbr.rel (%p181) target = $region16
        $region15: #{tpu_custom_call.1} parent=11 // pred_region
          _
        $region16: #{tpu_custom_call.1} parent=11 // pred_fallthru
          _
      $region12: #{tpu_custom_call.1} parent=5 // pred_fallthru
        _
      %p184 = scmp.lt.s32.totalorder %s21, 2
      // Predicated region
      $region17: #{tpu_custom_call.1} parent=5 // pred_check
        %p185 = pneg %p184
      $region18: #{tpu_custom_call.1} parent=5 // pred_check_branch
        %187 = sbr.rel (%p185) target = $region20
      $region19: #{tpu_custom_call.1} parent=5 // pred_region
        // Predicated region
        $region21: #{tpu_custom_call.1} parent=19 // pred_check
          %p188 = pneg %p76
        $region22: #{tpu_custom_call.1} parent=19 // pred_check_branch
          %190 = sbr.rel (%p188) target = $region24
        $region23: #{tpu_custom_call.1} parent=19 // pred_region
          %s191 = sand.u32 %s66, 1
          %s192 = scalar_lea.sflag [#allocation4], %s191
          %s193 = sand.u32 %s66, 1
          %s194 = smul.addr %s193, 2
          %s195 = scalar_lea.vmem [#allocation3], %s194
          %197 = vsyncadd %s192, 0
          %s198 = sadd.s32 %s29, %s28
          %s199 = smul.addr %s198, 2
          %s200 = scalar_lea.hbm %s1, %s199
          %s202 = sshll.u32 %s200, 4
          %s203 = int_to_ptr.hbm [resolvable:$true] %s202
          %s204 = sshll.u32 %s195, 4
          %s205 = int_to_ptr.vmem [resolvable:$true] %s204
          %207 = dma.hbm_to_vmem [thread:$0]  %s203, 32, %s205, %s192
        $region24: #{tpu_custom_call.1} parent=19 // pred_fallthru
          _
      $region20: #{tpu_custom_call.1} parent=5 // pred_fallthru
        _
      %p208 = scmp.le.s32.totalorder 1, %s21
      %p209 = scmp.lt.s32.totalorder %s21, 3
      %p210 = pnand %p208, %p209
      %p211 = pneg %p210
      // Predicated region
      $region25: #{tpu_custom_call.1} parent=5 // pred_check
        _
      $region26: #{tpu_custom_call.1} parent=5 // pred_check_branch
        %213 = sbr.rel (%p210) target = $region28
      $region27: #{tpu_custom_call.1} parent=5 // pred_region
        %s214 = ssub.s32 %s21, 1
        %s215 = sand.u32 %s69, 1
        %s216 = scalar_lea.sflag [#allocation4], %s215
        %s217 = sand.u32 %s69, 1
        %s218 = smul.addr %s217, 2
        %s219 = scalar_lea.vmem [#allocation3], %s218
        // Predicated region
        $region29: #{tpu_custom_call.1} parent=27 // pred_check
          %p220 = pneg %p82
        $region30: #{tpu_custom_call.1} parent=27 // pred_check_branch
          %222 = sbr.rel (%p220) target = $region32
        $region31: #{tpu_custom_call.1} parent=27 // pred_region
          %224 = dma.done %s216, 32
        $region32: #{tpu_custom_call.1} parent=27 // pred_fallthru
          _
        %p225 = pneg %p54
        %p226 = pneg %p51
        %s227 = sand.u32 %s69, 1
        %s228 = scalar_lea.sflag [#allocation4], %s227
        %s229 = sand.u32 %s69, 1
        %s230 = smul.addr %s229, 2
        %s231 = scalar_lea.vmem [#allocation3], %s230
        %p232 = pneg %p82
        %p233 = pneg %p79
        %p234 = pneg %p110
        %p235 = pneg %p107
        %s236 = sand.u32 %s97, 1
        %s237 = scalar_lea.sflag [#allocation5], %s236
        %s238 = sand.u32 %s97, 1
        %s239 = smul.addr %s238, 2
        %s240 = scalar_lea.vmem [#allocation6], %s239
        %p241 = pneg %p138
        %p242 = pneg %p135
        %s243 = sand.u32 %s26, 1
        %s244 = scalar_lea.sflag [#allocation8], %s243
        %s245 = sand.u32 %s125, 1
        %s246 = smul.addr %s245, 2
        %s247 = scalar_lea.vmem [#allocation7], %s246
        %p248 = pneg %p166
        %p249 = pneg %p163
        %s250 = sand.u32 %s26, 1
        %s251 = scalar_lea.sflag [#allocation8], %s250
        %s252 = sand.u32 %s153, 1
        %s253 = smul.addr %s252, 2
        %s254 = scalar_lea.vmem [#allocation9], %s253
        %v255 = vld [vmem:[%s219] sm:$0x3]
        %s256 = sld [smem:[#allocation2]]
        %v257 = vlaneseq
        %v258 = vand.u32 %v257, 127
        %vm259 = vcmp.lt.s32.totalorder %v258, 0
        %v260 = vsub.s32 0, %v258
        %v261 = vsel %vm259, %v260, %v258
        %v262 = vshrl.u32 %v261, 4
        %v263 = vand.u32 %v261, 15
        %v264 = vsub.s32 0, %v263
        %v265 = vsel %vm259, %v264, %v263
        %vm266 = vcmp.ne.s32.totalorder %v265, 0
        %vm267 = vcmp.lt.s32.totalorder %v265, 0
        %vm268 = vmand %vm267, %vm266
        %v269 = vadd.s32 %v265, 16
        %v270 = vsel %vm268, %v269, %v265
        %vm271 = vcmp.eq.s32.totalorder %v270, 0
        %vm272 = vcmp.eq.s32.totalorder %v270, 15
        %vm273 = vcmp.ge.s32.totalorder %v258, 16
        %vm274 = vcmp.lt.s32.totalorder %v258, 112
        %276 = vrot.lane.b32.xlu0 %v255, 1
        %v277 = vpop.permute.xlu0 %276
        %v279 = vsel %vm271, 1, 0
        %vm280 = vcmp.eq.s32.totalorder %v279, 1
        %v281 = vsel %vm280, 0.0, %v277
        %282 = vrot.lane.b32.xlu0 %v255, 127
        %v283 = vpop.permute.xlu0 %282
        %v285 = vsel %vm272, 1, 0
        %vm286 = vcmp.eq.s32.totalorder %v285, 1
        %v287 = vsel %vm286, 0.0, %v283
        %v288 = vsub.f32 %v287, %v281
        %v289 = vmul.f32 %v255, 2.0
        %v290 = vadd.f32 %v281, %v289
        %v291 = vadd.f32 %v290, %v287
        %v292 = vmul.f32 %v288, 2.0
        %294 = vrot.lane.b32.xlu0 %v288, 16
        %v295 = vpop.permute.xlu0 %294
        %v298 = vrot.slane %v295, 7
        %vm300 = vcmask 1040384
        %v301 = vsel %vm300, 0.0, %v298
        %v302 = vsel %vm273, 1, 0
        %vm303 = vcmp.eq.s32.totalorder %v302, 1
        %v304 = vsel %vm303, %v295, %v301
        %v305 = vadd.f32 %v292, %v304
        %306 = vrot.lane.b32.xlu0 %v288, 112
        %v307 = vpop.permute.xlu0 %306
        %v310 = vrot.slane %v307, 1
        %v313 = vrot.slane 0.0, 7
        %v315 = vsel %vm300, %v310, %v313
        %v316 = vsel %vm274, 1, 0
        %vm317 = vcmp.eq.s32.totalorder %v316, 1
        %v318 = vsel %vm317, %v307, %v315
        %v319 = vadd.f32 %v305, %v318
        %v320 = vstv %s256
        %v321 = vadd.f32 %v319, %v320
        %322 = vst [vmem:[%s247] sm:$0x3] %v321
        %324 = vrot.lane.b32.xlu0 %v291, 112
        %v325 = vpop.permute.xlu0 %324
        %v328 = vrot.slane %v325, 1
        %v330 = vsel %vm300, %v328, %v313
        %v331 = vsel %vm317, %v325, %v330
        %332 = vrot.lane.b32.xlu0 %v291, 16
        %v333 = vpop.permute.xlu0 %332
        %v336 = vrot.slane %v333, 7
        %v338 = vsel %vm300, 0.0, %v336
        %v339 = vsel %vm303, %v333, %v338
        %v340 = vsub.f32 %v331, %v339
        %v341 = vadd.f32 %v340, %v320
        %342 = vst [vmem:[%s254] sm:$0x3] %v341
        %v343 = vmul.f32 %v321, %v321
        %v344 = vmul.f32 %v341, %v341
        %v345 = vadd.f32 %v343, %v344
        %v346 = vrsqrt.pop %v345
        %v347 = vmul.f32 %v346, %v345
        %v348 = vmul.f32 %v347, %v346
        %v349 = vmul.f32 0.5, %v348
        %v350 = vsub.f32 1.5, %v349
        %v351 = vmul.f32 %v346, %v350
        %v352 = vmul.f32 %v345, %v351
        %vm353 = vcmp.eq.f32.partialorder %v345, inf
        %v354 = vsel %vm353, %v345, %v352
        %vm355 = vcmp.eq.f32.partialorder %v345, 0.0
        %v356 = vand.u32 %v345, 2147483648
        %v357 = vsel %vm355, %v356, %v354
        %358 = vst [vmem:[%s240] sm:$0x3] %v357
        %s359 = sand.u32 %s97, 1
        %s360 = scalar_lea.sflag [#allocation5], %s359
        %s361 = sand.u32 %s97, 1
        %s362 = smul.addr %s361, 2
        %s363 = scalar_lea.vmem [#allocation6], %s362
        %s364 = sand.u32 %s26, 1
        %s365 = scalar_lea.sflag [#allocation8], %s364
        %s366 = sand.u32 %s125, 1
        %s367 = smul.addr %s366, 2
        %s368 = scalar_lea.vmem [#allocation7], %s367
        %s369 = sand.u32 %s26, 1
        %s370 = scalar_lea.sflag [#allocation8], %s369
        %s371 = sand.u32 %s153, 1
        %s372 = smul.addr %s371, 2
        %s373 = scalar_lea.vmem [#allocation9], %s372
        // Predicated region
        $region33: #{tpu_custom_call.1} parent=27 // pred_check
          %p374 = pneg %p107
        $region34: #{tpu_custom_call.1} parent=27 // pred_check_branch
          %376 = sbr.rel (%p374) target = $region36
        $region35: #{tpu_custom_call.1} parent=27 // pred_region
          %378 = vsyncadd %s360, 0
          %s379 = sadd.s32 %s31, %s30
          %s380 = smul.addr %s379, 2
          %s381 = scalar_lea.hbm %s2, %s380
          %s383 = sshll.u32 %s363, 4
          %s384 = int_to_ptr.vmem [resolvable:$true] %s383
          %s385 = sshll.u32 %s381, 4
          %s386 = int_to_ptr.hbm [resolvable:$true] %s385
          %388 = dma.vmem_to_hbm [thread:$0]  %s384, 32, %s386, %s360
        $region36: #{tpu_custom_call.1} parent=27 // pred_fallthru
          _
        // Predicated region
        $region37: #{tpu_custom_call.1} parent=27 // pred_check
          %p389 = pneg %p135
        $region38: #{tpu_custom_call.1} parent=27 // pred_check_branch
          %391 = sbr.rel (%p389) target = $region40
        $region39: #{tpu_custom_call.1} parent=27 // pred_region
          %393 = vsyncadd %s365, 0
          %s394 = sadd.s32 %s31, %s30
          %s395 = smul.addr %s394, 2
          %s396 = scalar_lea.hbm %s3, %s395
          %s398 = sshll.u32 %s368, 4
          %s399 = int_to_ptr.vmem [resolvable:$true] %s398
          %s400 = sshll.u32 %s396, 4
          %s401 = int_to_ptr.hbm [resolvable:$true] %s400
          %403 = dma.vmem_to_hbm [thread:$0]  %s399, 32, %s401, %s365
        $region40: #{tpu_custom_call.1} parent=27 // pred_fallthru
          _
        // Predicated region
        $region41: #{tpu_custom_call.1} parent=27 // pred_check
          %p404 = pneg %p163
        $region42: #{tpu_custom_call.1} parent=27 // pred_check_branch
          %406 = sbr.rel (%p404) target = $region44
        $region43: #{tpu_custom_call.1} parent=27 // pred_region
          %408 = vsyncadd %s370, 0
          %s409 = sadd.s32 %s31, %s30
          %s410 = smul.addr %s409, 2
          %s411 = scalar_lea.hbm %s4, %s410
          %s413 = sshll.u32 %s373, 4
          %s414 = int_to_ptr.vmem [resolvable:$true] %s413
          %s415 = sshll.u32 %s411, 4
          %s416 = int_to_ptr.hbm [resolvable:$true] %s415
          %418 = dma.vmem_to_hbm [thread:$0]  %s414, 32, %s416, %s370
        $region44: #{tpu_custom_call.1} parent=27 // pred_fallthru
          _
      $region28: #{tpu_custom_call.1} parent=5 // pred_fallthru
        _
      %p419 = scmp.le.s32.totalorder 2, %s21
      // Predicated region
      $region45: #{tpu_custom_call.1} parent=5 // pred_check
        %p420 = pneg %p419
      $region46: #{tpu_custom_call.1} parent=5 // pred_check_branch
        %422 = sbr.rel (%p420) target = $region48
      $region47: #{tpu_custom_call.1} parent=5 // pred_region
        %s423 = ssub.s32 %s21, 2
        // Predicated region
        $region49: #{tpu_custom_call.1} parent=47 // pred_check
          %p424 = pneg %p113
        $region50: #{tpu_custom_call.1} parent=47 // pred_check_branch
          %426 = sbr.rel (%p424) target = $region52
        $region51: #{tpu_custom_call.1} parent=47 // pred_region
          %s427 = sand.u32 %s98, 1
          %s428 = scalar_lea.sflag [#allocation5], %s427
          %s429 = sand.u32 %s98, 1
          %s430 = smul.addr %s429, 2
          %s431 = scalar_lea.vmem [#allocation6], %s430
          %433 = dma.done %s428, 32
        $region52: #{tpu_custom_call.1} parent=47 // pred_fallthru
          _
        // Predicated region
        $region53: #{tpu_custom_call.1} parent=47 // pred_check
          %p434 = pneg %p141
        $region54: #{tpu_custom_call.1} parent=47 // pred_check_branch
          %436 = sbr.rel (%p434) target = $region56
        $region55: #{tpu_custom_call.1} parent=47 // pred_region
          %s437 = sand.u32 %s27, 1
          %s438 = scalar_lea.sflag [#allocation8], %s437
          %s439 = sand.u32 %s126, 1
          %s440 = smul.addr %s439, 2
          %s441 = scalar_lea.vmem [#allocation7], %s440
          %443 = dma.done %s438, 32
        $region56: #{tpu_custom_call.1} parent=47 // pred_fallthru
          _
        // Predicated region
        $region57: #{tpu_custom_call.1} parent=47 // pred_check
          %p444 = pneg %p169
        $region58: #{tpu_custom_call.1} parent=47 // pred_check_branch
          %446 = sbr.rel (%p444) target = $region60
        $region59: #{tpu_custom_call.1} parent=47 // pred_region
          %s447 = sand.u32 %s27, 1
          %s448 = scalar_lea.sflag [#allocation8], %s447
          %s449 = sand.u32 %s154, 1
          %s450 = smul.addr %s449, 2
          %s451 = scalar_lea.vmem [#allocation9], %s450
          %453 = dma.done %s448, 32
        $region60: #{tpu_custom_call.1} parent=47 // pred_fallthru
          _
      $region48: #{tpu_custom_call.1} parent=5 // pred_fallthru
        _
    $region6: #{tpu_custom_call.1} parent=1 // loop_footer
      %s25 = sadd.s32 1, %s21
    $region7: #{tpu_custom_call.1} parent=1 // loop_footer_branch
      %20 = sbr.rel target = $region3
    $region8: #{tpu_custom_call.1} parent=1 // loop_exit
      _
    %454 = vsyncpa [#allocation4], 1
    %s455 = scalar_lea.sflag [#allocation4], 1
    %456 = vsyncpa %s455, 1
    %457 = vsyncpa [#allocation5], 1
    %s458 = scalar_lea.sflag [#allocation5], 1
    %459 = vsyncpa %s458, 1
    %460 = vsyncpa [#allocation8], 1
    %s461 = scalar_lea.sflag [#allocation8], 1
    %462 = vsyncpa %s461, 1

</llo_original>
